<compile_context>
chip_gen: v5e
topology: v5e:2x2
jax: 0.10.0
libtpu: 0.0.40
codegen_flags: <defaults>
</compile_context>

<pallas_src>
import jax
import jax.numpy as jnp
from jax.experimental import pallas as pl
from jax.experimental.pallas import tpu as pltpu


def _round_up(x, m):
    return ((x + m - 1) // m) * m


def bm_forward_kernel(v_ref, wt_ref, c_ref, o_ref):
    # v_ref:  (bm, Vp)  batch tile of visible units (f32 or bf16)
    # wt_ref: (Vp, Hp)  pre-transposed couplings W.T  (f32 or bf16)
    # c_ref:  (1, Hp)   hidden bias (f32)
    # o_ref:  (bm, Hp)  output tile: p(h=1 | v) (f32)
    logits = jnp.dot(v_ref[...], wt_ref[...], preferred_element_type=jnp.float32)
    logits = logits + c_ref[...]  # (1, Hp) broadcasts over rows; f32 epilogue
    o_ref[...] = jax.nn.sigmoid(logits).astype(o_ref.dtype)


def bm_forward(visible, W, c, *, bm=128, compute_dtype=None):
    """p(h=1|v) = sigmoid(v @ W.T + c).

    visible: (B, V), W: (H, V), c: (H,).  Returns (B, H) float32.
    compute_dtype: dtype for the MXU inputs (e.g. jnp.bfloat16 on v6e/v7x);
                   accumulation / bias / sigmoid remain float32.
    """
    B, V = visible.shape
    H, V2 = W.shape
    assert V == V2 and c.shape == (H,)

    in_dtype = jnp.dtype(compute_dtype) if compute_dtype is not None else jnp.dtype(visible.dtype)

    # Pad to MXU/vreg-friendly shapes (lane-dense loads and stores).
    Vp = _round_up(V, 128)               # contraction (K) dim
    Hp = _round_up(H, 128)               # output lane (N) dim
    bm = min(bm, _round_up(B, 8))        # small batches -> one grid step
    Bp = _round_up(B, bm)

    vis_p = jnp.pad(visible.astype(in_dtype), ((0, Bp - B), (0, Vp - V)))
    wt_p = jnp.pad(W.T.astype(in_dtype), ((0, Vp - V), (0, Hp - H)))     # (Vp, Hp)
    c_p = jnp.pad(c.astype(jnp.float32), (0, Hp - H)).reshape(1, Hp)

    itemsize = in_dtype.itemsize
    cost = pl.CostEstimate(
        flops=2 * Bp * Vp * Hp,
        transcendentals=Bp * Hp,
        bytes_accessed=(Bp * Vp + Vp * Hp) * itemsize + (Hp + Bp * Hp) * 4,
    )

    # Double-buffered footprint estimate; raise the scoped-VMEM limit so larger
    # tiles are not rejected (clamped well below v7x's 64 MiB physical VMEM).
    vmem_need = 2 * (bm * Vp + Vp * Hp) * itemsize + 2 * (Hp + bm * Hp) * 4
    vmem_limit = int(min(max(2 * vmem_need, 32 * 1024 * 1024), 48 * 1024 * 1024))

    grid_spec = pltpu.PrefetchScalarGridSpec(
        num_scalar_prefetch=0,
        grid=(Bp // bm,),
        in_specs=[
            pl.BlockSpec((bm, Vp), lambda i: (i, 0)),   # batch tile of visible
            pl.BlockSpec((Vp, Hp), lambda i: (0, 0)),   # W.T: constant index map (fetched once)
            pl.BlockSpec((1, Hp), lambda i: (0, 0)),    # bias: constant index map
        ],
        out_specs=pl.BlockSpec((bm, Hp), lambda i: (i, 0)),
    )

    out_p = pl.pallas_call(
        bm_forward_kernel,
        out_shape=jax.ShapeDtypeStruct((Bp, Hp), jnp.float32),
        grid_spec=grid_spec,
        compiler_params=pltpu.CompilerParams(
            dimension_semantics=("parallel",),
            vmem_limit_bytes=vmem_limit,
        ),
        cost_estimate=cost,
    )(vis_p, wt_p, c_p)

    return out_p[:B, :H]


if __name__ == "__main__":
    # BoltzmannMachine(V=64, H=32), batch of 16 visible configurations.
    V, H, B = 64, 32, 16

    key = jax.random.PRNGKey(0)
    k_v, k_w, k_c = jax.random.split(key, 3)

    # Deterministic synthetic parameters (module __init__ defines only sizes).
    W = 0.1 * jax.random.normal(k_w, (H, V), dtype=jnp.float32)   # couplings
    c = 0.1 * jax.random.normal(k_c, (H,), dtype=jnp.float32)     # hidden bias

    # Binary-ish visible input.
    visible = (jax.random.uniform(k_v, (B, V)) > 0.5).astype(jnp.float32)

    # f32 path.
    out = jax.block_until_ready(bm_forward(visible, W, c))
    ref = jax.nn.sigmoid(visible @ W.T + c)
    assert out.shape == (B, H)
    assert jnp.allclose(out, ref, atol=1e-5, rtol=1e-5)

    # bf16-input path (v6e/v7x MXU full rate), f32 accumulation and epilogue.
    out_bf16 = jax.block_until_ready(
        bm_forward(visible, W, c, compute_dtype=jnp.bfloat16)
    )
    ref_bf16 = jax.nn.sigmoid(
        jnp.dot(visible.astype(jnp.bfloat16), W.T.astype(jnp.bfloat16),
                preferred_element_type=jnp.float32) + c
    )
    assert out_bf16.shape == (B, H)
    assert jnp.allclose(out_bf16, ref_bf16, atol=2e-2, rtol=2e-2)

    print("KERNEL_OK")
</pallas_src>

<mosaic_0001>
module attributes {stable_mosaic.version = 11 : i64} {
  func.func @bm_forward_kernel(%arg0: i32, %arg1: memref<16x128xf32, #tpu.memory_space<vmem>>, %arg2: memref<128x128xf32, #tpu.memory_space<vmem>>, %arg3: memref<1x128xf32, #tpu.memory_space<vmem>>, %arg4: memref<16x128xf32, #tpu.memory_space<vmem>>) attributes {dimension_semantics = [#tpu.dimension_semantics<parallel>], iteration_bounds = array<i64: 1>, scalar_prefetch = 0 : i64, scratch_operands = 0 : i64, tpu.core_type = #tpu.core_type<tc>, window_params = [{transform_indices = @transform_0, window_bounds = array<i64: 16, 128>}, {pipeline_mode = #tpu.pipeline_mode<synchronous>, transform_indices = @transform_1, window_bounds = array<i64: 128, 128>}, {pipeline_mode = #tpu.pipeline_mode<synchronous>, transform_indices = @transform_2, window_bounds = array<i64: 1, 128>}, {transform_indices = @transform_3, window_bounds = array<i64: 16, 128>}]} {
    %c0 = arith.constant 0 : index
    %c0_0 = arith.constant 0 : index
    %0 = vector.load %arg1[%c0, %c0_0] : memref<16x128xf32, #tpu.memory_space<vmem>>, vector<16x128xf32>
    %c0_1 = arith.constant 0 : index
    %c0_2 = arith.constant 0 : index
    %1 = vector.load %arg2[%c0_1, %c0_2] : memref<128x128xf32, #tpu.memory_space<vmem>>, vector<128x128xf32>
    %cst = arith.constant dense<0.000000e+00> : vector<16x128xf32>
    %2 = tpu.matmul %0, %1, %cst {dimension_numbers = #tpu.dot_dimension_numbers<[1], [0], [0], [1], [0, 0, 1, 1], [], []>} : vector<16x128xf32>, vector<128x128xf32>, vector<16x128xf32> -> vector<16x128xf32>
    %c0_3 = arith.constant 0 : index
    %c0_4 = arith.constant 0 : index
    %3 = vector.load %arg3[%c0_3, %c0_4] : memref<1x128xf32, #tpu.memory_space<vmem>>, vector<1x128xf32>
    %4 = vector.broadcast %3 : vector<1x128xf32> to vector<16x128xf32>
    %5 = arith.addf %2, %4 : vector<16x128xf32>
    %6 = arith.negf %5 : vector<16x128xf32>
    %7 = math.exp %6 : vector<16x128xf32>
    %cst_5 = arith.constant 1.000000e+00 : f32
    %8 = vector.broadcast %cst_5 : f32 to vector<16x128xf32>
    %9 = arith.addf %8, %7 : vector<16x128xf32>
    %10 = arith.divf %8, %9 : vector<16x128xf32>
    %c0_6 = arith.constant 0 : index
    %c0_7 = arith.constant 0 : index
    %11 = vector.load %arg4[%c0_6, %c0_7] : memref<16x128xf32, #tpu.memory_space<vmem>>, vector<16x128xf32>
    tpu.vector_store %arg4[%c0_6, %c0_7], %10 {strides = array<i32>} : memref<16x128xf32, #tpu.memory_space<vmem>>, vector<16x128xf32>,
    return
  }
  func.func @transform_0(%arg0: i32) -> (i32, i32) {
    %c0_i32 = arith.constant 0 : i32
    %c0_i32_0 = arith.constant 0 : i32
    return %arg0, %c0_i32 : i32, i32
  }
  func.func @transform_1(%arg0: i32) -> (i32, i32) {
    %c0_i32 = arith.constant 0 : i32
    %c0_i32_0 = arith.constant 0 : i32
    %c0_i32_1 = arith.constant 0 : i32
    return %c0_i32, %c0_i32_0 : i32, i32
  }
  func.func @transform_2(%arg0: i32) -> (i32, i32) {
    %c0_i32 = arith.constant 0 : i32
    %c0_i32_0 = arith.constant 0 : i32
    %c0_i32_1 = arith.constant 0 : i32
    return %c0_i32, %c0_i32_0 : i32, i32
  }
  func.func @transform_3(%arg0: i32) -> (i32, i32) {
    %c0_i32 = arith.constant 0 : i32
    %c0_i32_0 = arith.constant 0 : i32
    return %arg0, %c0_i32 : i32, i32
  }
}

</mosaic_0001>

<llo_original>
// kernel: tpu_custom_call.1
$region0: #{tpu_custom_call.1}
  #allocation0 [shape = 'u32[]', space=smem, size = 0x4, offset = 0x4, fixed_abs, tag = 'smem constant byte address 0x4 - core index']
  #allocation1 [shape = 'u32[72,128]{1,0:T(1,128)}', space=vmem, size = 0x9000, scoped, tag = 'internal scratch']
  %s0 = inlined_call_operand.hbm [shape: f32[16,128], index: 0, kind: input, shape index: {}]
  %s1 = inlined_call_operand.hbm [shape: f32[128,128], index: 1, kind: input, shape index: {}]
  %s2 = inlined_call_operand.vmem [shape: f32[1,128], index: 2, kind: input, shape index: {}]
  %s3 = inlined_call_operand.hbm [shape: f32[16,128], index: 3, kind: output, shape index: {}]
  %s4 = sld [smem:[#allocation0]]
  $region30: #{tpu_custom_call.1} parent=0
    _
  %s6 = ssub.s32 1, %s4
  %s7 = scalar_select 0, %s6, %s4
  $region1: #{tpu_custom_call.1} parent=0
    #allocation2 [shape = 'u8[8192]{0}', space=vmem, size = 0x2000, scoped, tag = 'input window, operand 0, single buffered']
    #allocation3 [shape = 's32[1]{0}', space=sflag, size = 0x4, scoped, tag = 'scoped memory for tpu_custom_call.1']
    #allocation4 [shape = 's32[1]{0}', space=sflag, size = 0x4, scoped, tag = 'scoped memory for tpu_custom_call.1']
    #allocation5 [shape = 'u8[65536]{0}', space=vmem, size = 0x10000, scoped, tag = 'input window, operand 1, single buffered']
    #allocation6 [shape = 's32[1]{0}', space=sflag, size = 0x4, scoped, tag = 'scoped memory for tpu_custom_call.1']
    #allocation7 [shape = 'u8[8192]{0}', space=vmem, size = 0x2000, scoped, tag = 'output window, operand 0, single buffered']
    %8 = vsyncpa [#allocation3], 0
    %9 = vsyncpa [#allocation6], 0
    %10 = vsyncpa [#allocation4], 0
    // Predicated region
    $region2: #{tpu_custom_call.1} parent=1 // pred_check
      _
    $region3: #{tpu_custom_call.1} parent=1 // pred_check_branch
      %12 = sbr.rel (0) target = $region5
    $region4: #{tpu_custom_call.1} parent=1 // pred_region
      %14 = vsyncadd [#allocation3], 0
      %s15 = sshll.u32 %s0, 4
      %s16 = int_to_ptr.hbm [resolvable:$true] %s15
      %s17 = sshll.u32 [#allocation2], 4
      %s18 = int_to_ptr.vmem [resolvable:$true] %s17
      %23 = dma.hbm_to_vmem [thread:$0]  %s16, 256, %s18, [#allocation3], 128, 128, 8
    $region5: #{tpu_custom_call.1} parent=1 // pred_fallthru
      _
    // Predicated region
    $region6: #{tpu_custom_call.1} parent=1 // pred_check
      _
    $region7: #{tpu_custom_call.1} parent=1 // pred_check_branch
      %25 = sbr.rel (0) target = $region9
    $region8: #{tpu_custom_call.1} parent=1 // pred_region
      %27 = vsyncadd [#allocation6], 0
      %s28 = sshll.u32 %s1, 4
      %s29 = int_to_ptr.hbm [resolvable:$true] %s28
      %s30 = sshll.u32 [#allocation5], 4
      %s31 = int_to_ptr.vmem [resolvable:$true] %s30
      %36 = dma.hbm_to_vmem [thread:$0]  %s29, 2048, %s31, [#allocation6], 128, 128, 8
    $region9: #{tpu_custom_call.1} parent=1 // pred_fallthru
      _
    // Predicated region
    $region10: #{tpu_custom_call.1} parent=1 // pred_check
      _
    $region11: #{tpu_custom_call.1} parent=1 // pred_check_branch
      %38 = sbr.rel (0) target = $region13
    $region12: #{tpu_custom_call.1} parent=1 // pred_region
      _
    $region13: #{tpu_custom_call.1} parent=1 // pred_fallthru
      _
    // Predicated region
    $region14: #{tpu_custom_call.1} parent=1 // pred_check
      _
    $region15: #{tpu_custom_call.1} parent=1 // pred_check_branch
      %40 = sbr.rel (0) target = $region17
    $region16: #{tpu_custom_call.1} parent=1 // pred_region
      %42 = dma.done [#allocation3], 256
    $region17: #{tpu_custom_call.1} parent=1 // pred_fallthru
      _
    // Predicated region
    $region18: #{tpu_custom_call.1} parent=1 // pred_check
      _
    $region19: #{tpu_custom_call.1} parent=1 // pred_check_branch
      %44 = sbr.rel (0) target = $region21
    $region20: #{tpu_custom_call.1} parent=1 // pred_region
      %46 = dma.done [#allocation6], 2048
    $region21: #{tpu_custom_call.1} parent=1 // pred_fallthru
      _
    %v47 = vld [vmem:[#allocation2] sm:$0xff]
    %v48 = vld [vmem:[#allocation2 + $0x8] sm:$0xff]
    %v49 = vld [vmem:[#allocation5] sm:$0xff]
    %v50 = vld [vmem:[#allocation5 + $0x8] sm:$0xff]
    %v51 = vld [vmem:[#allocation5 + $0x10] sm:$0xff]
    %v52 = vld [vmem:[#allocation5 + $0x18] sm:$0xff]
    %v53 = vld [vmem:[#allocation5 + $0x20] sm:$0xff]
    %v54 = vld [vmem:[#allocation5 + $0x28] sm:$0xff]
    %v55 = vld [vmem:[#allocation5 + $0x30] sm:$0xff]
    %v56 = vld [vmem:[#allocation5 + $0x38] sm:$0xff]
    %v57 = vld [vmem:[#allocation5 + $0x40] sm:$0xff]
    %v58 = vld [vmem:[#allocation5 + $0x48] sm:$0xff]
    %v59 = vld [vmem:[#allocation5 + $0x50] sm:$0xff]
    %v60 = vld [vmem:[#allocation5 + $0x58] sm:$0xff]
    %v61 = vld [vmem:[#allocation5 + $0x60] sm:$0xff]
    %v62 = vld [vmem:[#allocation5 + $0x68] sm:$0xff]
    %v63 = vld [vmem:[#allocation5 + $0x70] sm:$0xff]
    %v64 = vld [vmem:[#allocation5 + $0x78] sm:$0xff]
    %v65 = vld [vmem:[%s2] sm:$0x1]
    %v67 = vperm.slane %v65, 0
    %69 = vmatpush.msra.mxu0 %v64
    %70 = vmatpush.msra.mxu0 %v63
    %71 = vmatpush.msra.mxu0 %v62
    %72 = vmatpush.msra.mxu0 %v61
    %73 = vmatpush.msra.mxu0 %v60
    %74 = vmatpush.msra.mxu0 %v59
    %75 = vmatpush.msra.mxu0 %v58
    %76 = vmatpush.msra.mxu0 %v57
    %77 = vmatpush.msra.mxu0 %v56
    %78 = vmatpush.msra.mxu0 %v55
    %79 = vmatpush.msra.mxu0 %v54
    %80 = vmatpush.msra.mxu0 %v53
    %81 = vmatpush.msra.mxu0 %v52
    %82 = vmatpush.msra.mxu0 %v51
    %83 = vmatpush.msra.mxu0 %v50
    %84 = vmatpush.msra.mxu0 %v49
    %85 = vmatmul.f32.gmra.mxu0 %v47
    %v86 = vpop.f32.mrf.mxu0
    %v87 = vadd.f32 %v67, %v86
    %88 = vmatmul.f32.gmra.mxu0 %v48
    %v89 = vpop.f32.mrf.mxu0
    %v90 = vadd.f32 %v67, %v89
    %91 = vdwg.mxu0
    %v92 = vxor.u32 %v87, 2147483648
    %v93 = vxor.u32 %v90, 2147483648
    %v94 = vmul.f32 %v92, 1.442695
    %v95 = vpow.pop %v94
    %v96 = vmul.f32 %v93, 1.442695
    %v97 = vpow.pop %v96
    %v98 = vadd.f32 %v95, 1.0
    %v99 = vadd.f32 %v97, 1.0
    %v100 = vrcp.pop %v98
    %v101 = vmul.f32 %v98, %v100
    %v102 = vsub.f32 1.0, %v101
    %v103 = vmul.f32 %v100, %v102
    %v104 = vadd.f32 %v100, %v103
    %vm105 = vweird.f32 %v98
    %vm106 = vweird.f32 %v100
    %vm107 = vmor %vm105, %vm106
    %v108 = vsel %vm107, %v100, %v104
    %v109 = vand.u32 2147483647, %v98
    %vm110 = vcmp.eq.f32.partialorder %v109, 8.507059e+37
    %v111 = vand.u32 %v98, 2147483648
    %v112 = vor.u32 1.1754944e-38, %v111
    %v113 = vsel %vm110, %v112, %v108
    %v114 = vmul.f32 1.0, %v113
    %v115 = vrcp.pop %v99
    %v116 = vmul.f32 %v99, %v115
    %v117 = vsub.f32 1.0, %v116
    %v118 = vmul.f32 %v115, %v117
    %v119 = vadd.f32 %v115, %v118
    %vm120 = vweird.f32 %v99
    %vm121 = vweird.f32 %v115
    %vm122 = vmor %vm120, %vm121
    %v123 = vsel %vm122, %v115, %v119
    %v124 = vand.u32 2147483647, %v99
    %vm125 = vcmp.eq.f32.partialorder %v124, 8.507059e+37
    %v126 = vand.u32 %v99, 2147483648
    %v127 = vor.u32 1.1754944e-38, %v126
    %v128 = vsel %vm125, %v127, %v123
    %v129 = vmul.f32 1.0, %v128
    %130 = vst [vmem:[#allocation7] sm:$0xff] %v114
    %131 = vst [vmem:[#allocation7 + $0x8] sm:$0xff] %v129
    // Predicated region
    $region22: #{tpu_custom_call.1} parent=1 // pred_check
      _
    $region23: #{tpu_custom_call.1} parent=1 // pred_check_branch
      %133 = sbr.rel (0) target = $region25
    $region24: #{tpu_custom_call.1} parent=1 // pred_region
      %135 = vsyncadd [#allocation4], 0
      %s136 = sshll.u32 [#allocation7], 4
      %s137 = int_to_ptr.vmem [resolvable:$true] %s136
      %s138 = sshll.u32 %s3, 4
      %s139 = int_to_ptr.hbm [resolvable:$true] %s138
      %144 = dma.vmem_to_hbm [thread:$0]  %s137, 256, %s139, [#allocation4], 128, 128, 8
    $region25: #{tpu_custom_call.1} parent=1 // pred_fallthru
      _
    // Predicated region
    $region26: #{tpu_custom_call.1} parent=1 // pred_check
      _
    $region27: #{tpu_custom_call.1} parent=1 // pred_check_branch
      %146 = sbr.rel (0) target = $region29
    $region28: #{tpu_custom_call.1} parent=1 // pred_region
      %148 = dma.done [#allocation4], 256
    $region29: #{tpu_custom_call.1} parent=1 // pred_fallthru
      _
    %149 = vsyncpa [#allocation3], 1
    %150 = vsyncpa [#allocation6], 1
    %151 = vsyncpa [#allocation4], 1

</llo_original>
